<compile_context>
chip_gen: v5e
topology: v5e:2x2
jax: 0.10.0
libtpu: 0.0.40
codegen_flags: <defaults>
</compile_context>

<pallas_src>
import jax
import jax.numpy as jnp
from jax import lax
from jax.experimental import pallas as pl
from jax.experimental.pallas import tpu as pltpu

# Problem sizes: MV2Block(inp=4, oup=4, stride=1, expansion=4)
N, C, H, W = 2, 4, 16, 16
EXP = 4
HID = C * EXP                # 16
S = H * W                    # 256 flattened spatial size -> lane axis
NC = N * C                   # 8  = exactly one dense f32 sublane tile
NH = N * HID                 # 32
EPS = 1e-5

assert (W & (W - 1)) == 0, "W must be a power of two for the &/>> decode below"
LOG2W = W.bit_length() - 1


def mv2_kernel(x_ref, w1_ref, b1_ref, wdw_ref, b2_ref, w3_ref, b3_ref, o_ref):
    # ---- edge-validity masks for the depthwise conv (computed once) ---------
    pos = lax.broadcasted_iota(jnp.int32, (1, S), 1)
    xpos = pos & (W - 1)
    ypos = pos >> LOG2W
    m_x = {
        -1: (xpos >= 1).astype(jnp.float32),        # valid outputs for dx = -1
        0: None,
        1: (xpos <= W - 2).astype(jnp.float32),     # valid outputs for dx = +1
    }
    m_y = {
        -1: (ypos >= 1).astype(jnp.float32),        # valid outputs for dy = -1
        0: None,
        1: (ypos <= H - 2).astype(jnp.float32),     # valid outputs for dy = +1
    }

    def silu(t):
        # exp on the EUP; exact reciprocal (see TODO at top of file).
        return t * pl.reciprocal(1.0 + jnp.exp(-t), approx=False)

    x = x_ref[...].astype(jnp.float32)                                # (NC, S)

    # ---- 1x1 expand conv (+ folded BN1) + SiLU : one MXU matmul -------------
    h = jnp.dot(w1_ref[...], x, preferred_element_type=jnp.float32) + b1_ref[...]
    h = silu(h)                                                       # (NH, S)

    # ---- 3x3 depthwise conv (stride 1, pad 1): 9 lane-rolled MACs -----------
    # Rolling along the lane axis never mixes images (batch lives in sublanes);
    # wrap-around pixels are removed by the x/y edge masks.
    taps = [wdw_ref[t] for t in range(9)]                             # 9 x (NH,1)
    acc = jnp.zeros((NH, S), jnp.float32)
    for dy in (-1, 0, 1):
        row = jnp.zeros((NH, S), jnp.float32)
        for dx in (-1, 0, 1):
            t = (dy + 1) * 3 + (dx + 1)
            off = dy * W + dx                       # flattened source offset
            src = h if off == 0 else pltpu.roll(h, shift=(-off) % S, axis=1)
            term = src * taps[t]
            if m_x[dx] is not None:
                term = term * m_x[dx]               # mask x-edge wrap-around
            row = row + term
        if m_y[dy] is not None:
            row = row * m_y[dy]                     # mask y-edge wrap-around
        acc = acc + row
    dwa = silu(acc + b2_ref[...])                                     # (NH, S)

    # ---- 1x1 project conv (+ folded BN3) + residual add ---------------------
    y = jnp.dot(w3_ref[...], dwa, preferred_element_type=jnp.float32)
    y = y + b3_ref[...] + x
    o_ref[...] = y.astype(o_ref.dtype)


def mv2_block(x_nchw, packed_params):
    """x_nchw: (N, C, H, W); packed_params: batch-fused, BN-folded weights."""
    w1p, b1p, wdwp, b2p, w3p, b3p = packed_params
    x2 = x_nchw.reshape(NC, S)          # NCHW is already channels-major: no transpose

    def full(shape):
        return pl.BlockSpec(shape, lambda i, _r=len(shape): (0,) * _r)

    out = pl.pallas_call(
        mv2_kernel,
        out_shape=jax.ShapeDtypeStruct((NC, S), x_nchw.dtype),
        grid_spec=pltpu.PrefetchScalarGridSpec(
            num_scalar_prefetch=0,
            grid=(1,),                  # whole problem in one grid step
            in_specs=[
                full((NC, S)),                         # x, both images packed
                full((NH, NC)), full((NH, 1)),         # expand weight / bias
                full((9, NH, 1)), full((NH, 1)),       # depthwise taps / bias
                full((NC, NH)), full((NC, 1)),         # project weight / bias
            ],
            out_specs=full((NC, S)),
        ),
        compiler_params=pltpu.CompilerParams(
            dimension_semantics=("arbitrary",)),
    )(x2, w1p, b1p, wdwp, b2p, w3p, b3p)

    return out.reshape(N, C, H, W)


# ---------------- host-side parameter packing (BN fold + batch fusion) -------
def pack_params(w1_oihw, bn1, wdw_oihw, bn2, w3_oihw, bn3):
    def fold(p):                        # BN (eval mode) -> per-channel scale/bias
        g, b, m, v = p
        sc = g / jnp.sqrt(v + EPS)
        return sc, b - m * sc

    s1, b1 = fold(bn1)
    s2, b2 = fold(bn2)
    s3, b3 = fold(bn3)

    w1 = w1_oihw[:, :, 0, 0] * s1[:, None]                    # (HID, C)
    wdw = wdw_oihw[:, 0].reshape(HID, 9) * s2[:, None]        # (HID, 9)
    wdw = jnp.transpose(wdw).reshape(9, HID, 1)               # (9, HID, 1)
    w3 = w3_oihw[:, :, 0, 0] * s3[:, None]                    # (C, HID)

    def blkdiag(w, n):                  # (o,i) -> (n*o, n*i) block diagonal
        o, i = w.shape
        z = jnp.zeros((n * o, n * i), w.dtype)
        for k in range(n):
            z = z.at[k * o:(k + 1) * o, k * i:(k + 1) * i].set(w)
        return z

    w1p = blkdiag(w1, N)                                      # (NH, NC)
    w3p = blkdiag(w3, N)                                      # (NC, NH)
    wdwp = jnp.tile(wdw, (1, N, 1))                           # (9, NH, 1)
    b1p = jnp.tile(b1.reshape(HID, 1), (N, 1))                # (NH, 1)
    b2p = jnp.tile(b2.reshape(HID, 1), (N, 1))                # (NH, 1)
    b3p = jnp.tile(b3.reshape(C, 1), (N, 1))                  # (NC, 1)
    return (w1p, b1p, wdwp, b2p, w3p, b3p)


# ---------------- pure-JAX reference (mirrors the PyTorch forward) -----------
def torch_like_ref(x, w1_oihw, bn1, wdw_oihw, bn2, w3_oihw, bn3):
    dn = ('NCHW', 'OIHW', 'NCHW')

    def bn(h, p):
        g, b, m, v = p
        return ((h - m[None, :, None, None]) /
                jnp.sqrt(v[None, :, None, None] + EPS) *
                g[None, :, None, None] + b[None, :, None, None])

    silu = lambda t: t * jax.nn.sigmoid(t)
    h = lax.conv_general_dilated(x, w1_oihw, (1, 1), 'VALID',
                                 dimension_numbers=dn)
    h = silu(bn(h, bn1))
    h = lax.conv_general_dilated(h, wdw_oihw, (1, 1), [(1, 1), (1, 1)],
                                 dimension_numbers=dn,
                                 feature_group_count=HID)
    h = silu(bn(h, bn2))
    h = lax.conv_general_dilated(h, w3_oihw, (1, 1), 'VALID',
                                 dimension_numbers=dn)
    h = bn(h, bn3)
    return h + x


if __name__ == "__main__":
    key = jax.random.PRNGKey(0)
    ks = jax.random.split(key, 8)
    x = jax.random.normal(ks[0], (N, C, H, W), jnp.float32)

    # Deterministic synthetic parameters (PyTorch weight layouts: OIHW).
    w1_oihw = 0.1 * jax.random.normal(ks[1], (HID, C, 1, 1), jnp.float32)
    wdw_oihw = 0.1 * jax.random.normal(ks[2], (HID, 1, 3, 3), jnp.float32)
    w3_oihw = 0.1 * jax.random.normal(ks[3], (C, HID, 1, 1), jnp.float32)

    def bn_params(k, dim):
        k1, k2, k3, k4 = jax.random.split(k, 4)
        gamma = 1.0 + 0.1 * jax.random.normal(k1, (dim,), jnp.float32)
        beta = 0.1 * jax.random.normal(k2, (dim,), jnp.float32)
        mean = 0.1 * jax.random.normal(k3, (dim,), jnp.float32)
        var = jax.random.uniform(k4, (dim,), jnp.float32, minval=0.5, maxval=1.5)
        return gamma, beta, mean, var

    bn1 = bn_params(ks[4], HID)
    bn2 = bn_params(ks[5], HID)
    bn3 = bn_params(ks[6], C)

    params = pack_params(w1_oihw, bn1, wdw_oihw, bn2, w3_oihw, bn3)

    out = jax.block_until_ready(mv2_block(x, params))
    ref = jax.block_until_ready(
        torch_like_ref(x, w1_oihw, bn1, wdw_oihw, bn2, w3_oihw, bn3))

    assert out.shape == (N, C, H, W)
    err = float(jnp.max(jnp.abs(out - ref)))
    assert jnp.allclose(out, ref, rtol=1e-4, atol=1e-4), f"max abs err {err}"
    print("KERNEL_OK")
</pallas_src>

<mosaic_0001>
module attributes {stable_mosaic.version = 11 : i64} {
  func.func @mv2_kernel(%arg0: i32, %arg1: memref<8x256xf32, #tpu.memory_space<vmem>>, %arg2: memref<32x8xf32, #tpu.memory_space<vmem>>, %arg3: memref<32x1xf32, #tpu.memory_space<vmem>>, %arg4: memref<9x32x1xf32, #tpu.memory_space<vmem>>, %arg5: memref<32x1xf32, #tpu.memory_space<vmem>>, %arg6: memref<8x32xf32, #tpu.memory_space<vmem>>, %arg7: memref<8x1xf32, #tpu.memory_space<vmem>>, %arg8: memref<8x256xf32, #tpu.memory_space<vmem>>) attributes {dimension_semantics = [#tpu.dimension_semantics<arbitrary>], iteration_bounds = array<i64: 1>, scalar_prefetch = 0 : i64, scratch_operands = 0 : i64, tpu.core_type = #tpu.core_type<tc>, window_params = [{pipeline_mode = #tpu.pipeline_mode<synchronous>, transform_indices = @transform_0, window_bounds = array<i64: 8, 256>}, {pipeline_mode = #tpu.pipeline_mode<synchronous>, transform_indices = @transform_1, window_bounds = array<i64: 32, 8>}, {pipeline_mode = #tpu.pipeline_mode<synchronous>, transform_indices = @transform_2, window_bounds = array<i64: 32, 1>}, {pipeline_mode = #tpu.pipeline_mode<synchronous>, transform_indices = @transform_3, window_bounds = array<i64: 9, 32, 1>}, {pipeline_mode = #tpu.pipeline_mode<synchronous>, transform_indices = @transform_4, window_bounds = array<i64: 32, 1>}, {pipeline_mode = #tpu.pipeline_mode<synchronous>, transform_indices = @transform_5, window_bounds = array<i64: 8, 32>}, {pipeline_mode = #tpu.pipeline_mode<synchronous>, transform_indices = @transform_6, window_bounds = array<i64: 8, 1>}, {pipeline_mode = #tpu.pipeline_mode<synchronous>, transform_indices = @transform_7, window_bounds = array<i64: 8, 256>}]} {
    %0 = tpu.iota {dimensions = array<i32: 1>} : vector<1x256xi32>
    %c15_i32 = arith.constant 15 : i32
    %1 = vector.broadcast %c15_i32 : i32 to vector<1x256xi32>
    %2 = arith.andi %0, %1 : vector<1x256xi32>
    %c4_i32 = arith.constant 4 : i32
    %3 = vector.broadcast %c4_i32 : i32 to vector<1x256xi32>
    %4 = arith.shrsi %0, %3 : vector<1x256xi32>
    %c1_i32 = arith.constant 1 : i32
    %5 = vector.broadcast %c1_i32 : i32 to vector<1x256xi32>
    %6 = arith.cmpi sge, %2, %5 : vector<1x256xi32>
    %7 = arith.extui %6 : vector<1x256xi1> to vector<1x256xi32>
    %8 = arith.sitofp %7 : vector<1x256xi32> to vector<1x256xf32>
    %c14_i32 = arith.constant 14 : i32
    %9 = vector.broadcast %c14_i32 : i32 to vector<1x256xi32>
    %10 = arith.cmpi sle, %2, %9 : vector<1x256xi32>
    %11 = arith.extui %10 : vector<1x256xi1> to vector<1x256xi32>
    %12 = arith.sitofp %11 : vector<1x256xi32> to vector<1x256xf32>
    %c1_i32_0 = arith.constant 1 : i32
    %13 = vector.broadcast %c1_i32_0 : i32 to vector<1x256xi32>
    %14 = arith.cmpi sge, %4, %13 : vector<1x256xi32>
    %15 = arith.extui %14 : vector<1x256xi1> to vector<1x256xi32>
    %16 = arith.sitofp %15 : vector<1x256xi32> to vector<1x256xf32>
    %c14_i32_1 = arith.constant 14 : i32
    %17 = vector.broadcast %c14_i32_1 : i32 to vector<1x256xi32>
    %18 = arith.cmpi sle, %4, %17 : vector<1x256xi32>
    %19 = arith.extui %18 : vector<1x256xi1> to vector<1x256xi32>
    %20 = arith.sitofp %19 : vector<1x256xi32> to vector<1x256xf32>
    %c0 = arith.constant 0 : index
    %c0_2 = arith.constant 0 : index
    %21 = vector.load %arg1[%c0, %c0_2] : memref<8x256xf32, #tpu.memory_space<vmem>>, vector<8x256xf32>
    %c0_3 = arith.constant 0 : index
    %c0_4 = arith.constant 0 : index
    %22 = vector.load %arg2[%c0_3, %c0_4] : memref<32x8xf32, #tpu.memory_space<vmem>>, vector<32x8xf32>
    %cst = arith.constant dense<0.000000e+00> : vector<32x256xf32>
    %23 = tpu.matmul %22, %21, %cst {dimension_numbers = #tpu.dot_dimension_numbers<[1], [0], [0], [1], [0, 0, 1, 1], [], []>} : vector<32x8xf32>, vector<8x256xf32>, vector<32x256xf32> -> vector<32x256xf32>
    %c0_5 = arith.constant 0 : index
    %c0_6 = arith.constant 0 : index
    %24 = vector.load %arg3[%c0_5, %c0_6] : memref<32x1xf32, #tpu.memory_space<vmem>>, vector<32x1xf32>
    %25 = vector.broadcast %24 : vector<32x1xf32> to vector<32x256xf32>
    %26 = arith.addf %23, %25 : vector<32x256xf32>
    %cst_7 = arith.constant 0.000000e+00 : f32
    %27 = vector.broadcast %cst_7 : f32 to vector<32x256xf32>
    %28 = arith.subf %27, %26 : vector<32x256xf32>
    %29 = math.exp %28 : vector<32x256xf32>
    %cst_8 = arith.constant 1.000000e+00 : f32
    %30 = vector.broadcast %cst_8 : f32 to vector<32x256xf32>
    %31 = arith.addf %30, %29 : vector<32x256xf32>
    %32 = tpu.reciprocal %31 : vector<32x256xf32> -> vector<32x256xf32>
    %33 = arith.mulf %26, %32 : vector<32x256xf32>
    %c0_9 = arith.constant 0 : index
    %c0_10 = arith.constant 0 : index
    %c0_11 = arith.constant 0 : index
    %34 = vector.load %arg4[%c0_9, %c0_10, %c0_11] : memref<9x32x1xf32, #tpu.memory_space<vmem>>, vector<1x32x1xf32>
    %35 = vector.shape_cast %34 : vector<1x32x1xf32> to vector<32x1xf32>
    %c1 = arith.constant 1 : index
    %c0_12 = arith.constant 0 : index
    %c0_13 = arith.constant 0 : index
    %36 = vector.load %arg4[%c1, %c0_12, %c0_13] : memref<9x32x1xf32, #tpu.memory_space<vmem>>, vector<1x32x1xf32>
    %37 = vector.shape_cast %36 : vector<1x32x1xf32> to vector<32x1xf32>
    %c2 = arith.constant 2 : index
    %c0_14 = arith.constant 0 : index
    %c0_15 = arith.constant 0 : index
    %38 = vector.load %arg4[%c2, %c0_14, %c0_15] : memref<9x32x1xf32, #tpu.memory_space<vmem>>, vector<1x32x1xf32>
    %39 = vector.shape_cast %38 : vector<1x32x1xf32> to vector<32x1xf32>
    %c3 = arith.constant 3 : index
    %c0_16 = arith.constant 0 : index
    %c0_17 = arith.constant 0 : index
    %40 = vector.load %arg4[%c3, %c0_16, %c0_17] : memref<9x32x1xf32, #tpu.memory_space<vmem>>, vector<1x32x1xf32>
    %41 = vector.shape_cast %40 : vector<1x32x1xf32> to vector<32x1xf32>
    %c4 = arith.constant 4 : index
    %c0_18 = arith.constant 0 : index
    %c0_19 = arith.constant 0 : index
    %42 = vector.load %arg4[%c4, %c0_18, %c0_19] : memref<9x32x1xf32, #tpu.memory_space<vmem>>, vector<1x32x1xf32>
    %43 = vector.shape_cast %42 : vector<1x32x1xf32> to vector<32x1xf32>
    %c5 = arith.constant 5 : index
    %c0_20 = arith.constant 0 : index
    %c0_21 = arith.constant 0 : index
    %44 = vector.load %arg4[%c5, %c0_20, %c0_21] : memref<9x32x1xf32, #tpu.memory_space<vmem>>, vector<1x32x1xf32>
    %45 = vector.shape_cast %44 : vector<1x32x1xf32> to vector<32x1xf32>
    %c6 = arith.constant 6 : index
    %c0_22 = arith.constant 0 : index
    %c0_23 = arith.constant 0 : index
    %46 = vector.load %arg4[%c6, %c0_22, %c0_23] : memref<9x32x1xf32, #tpu.memory_space<vmem>>, vector<1x32x1xf32>
    %47 = vector.shape_cast %46 : vector<1x32x1xf32> to vector<32x1xf32>
    %c7 = arith.constant 7 : index
    %c0_24 = arith.constant 0 : index
    %c0_25 = arith.constant 0 : index
    %48 = vector.load %arg4[%c7, %c0_24, %c0_25] : memref<9x32x1xf32, #tpu.memory_space<vmem>>, vector<1x32x1xf32>
    %49 = vector.shape_cast %48 : vector<1x32x1xf32> to vector<32x1xf32>
    %c8 = arith.constant 8 : index
    %c0_26 = arith.constant 0 : index
    %c0_27 = arith.constant 0 : index
    %50 = vector.load %arg4[%c8, %c0_26, %c0_27] : memref<9x32x1xf32, #tpu.memory_space<vmem>>, vector<1x32x1xf32>
    %51 = vector.shape_cast %50 : vector<1x32x1xf32> to vector<32x1xf32>
    %cst_28 = arith.constant 0.000000e+00 : f32
    %52 = vector.broadcast %cst_28 : f32 to vector<32x256xf32>
    %cst_29 = arith.constant 0.000000e+00 : f32
    %53 = vector.broadcast %cst_29 : f32 to vector<32x256xf32>
    %c17_i32 = arith.constant 17 : i32
    %54 = tpu.dynamic_rotate %33 by %c17_i32 dim 1 : vector<32x256xf32>, i32 -> vector<32x256xf32>
    %55 = vector.broadcast %35 : vector<32x1xf32> to vector<32x256xf32>
    %56 = arith.mulf %54, %55 : vector<32x256xf32>
    %57 = vector.broadcast %8 : vector<1x256xf32> to vector<32x256xf32>
    %58 = arith.mulf %56, %57 : vector<32x256xf32>
    %59 = arith.addf %53, %58 : vector<32x256xf32>
    %c16_i32 = arith.constant 16 : i32
    %60 = tpu.dynamic_rotate %33 by %c16_i32 dim 1 : vector<32x256xf32>, i32 -> vector<32x256xf32>
    %61 = vector.broadcast %37 : vector<32x1xf32> to vector<32x256xf32>
    %62 = arith.mulf %60, %61 : vector<32x256xf32>
    %63 = arith.addf %59, %62 : vector<32x256xf32>
    %c15_i32_30 = arith.constant 15 : i32
    %64 = tpu.dynamic_rotate %33 by %c15_i32_30 dim 1 : vector<32x256xf32>, i32 -> vector<32x256xf32>
    %65 = vector.broadcast %39 : vector<32x1xf32> to vector<32x256xf32>
    %66 = arith.mulf %64, %65 : vector<32x256xf32>
    %67 = vector.broadcast %12 : vector<1x256xf32> to vector<32x256xf32>
    %68 = arith.mulf %66, %67 : vector<32x256xf32>
    %69 = arith.addf %63, %68 : vector<32x256xf32>
    %70 = vector.broadcast %16 : vector<1x256xf32> to vector<32x256xf32>
    %71 = arith.mulf %69, %70 : vector<32x256xf32>
    %72 = arith.addf %52, %71 : vector<32x256xf32>
    %cst_31 = arith.constant 0.000000e+00 : f32
    %73 = vector.broadcast %cst_31 : f32 to vector<32x256xf32>
    %c1_i32_32 = arith.constant 1 : i32
    %74 = tpu.dynamic_rotate %33 by %c1_i32_32 dim 1 : vector<32x256xf32>, i32 -> vector<32x256xf32>
    %75 = vector.broadcast %41 : vector<32x1xf32> to vector<32x256xf32>
    %76 = arith.mulf %74, %75 : vector<32x256xf32>
    %77 = vector.broadcast %8 : vector<1x256xf32> to vector<32x256xf32>
    %78 = arith.mulf %76, %77 : vector<32x256xf32>
    %79 = arith.addf %73, %78 : vector<32x256xf32>
    %80 = vector.broadcast %43 : vector<32x1xf32> to vector<32x256xf32>
    %81 = arith.mulf %33, %80 : vector<32x256xf32>
    %82 = arith.addf %79, %81 : vector<32x256xf32>
    %c255_i32 = arith.constant 255 : i32
    %83 = tpu.dynamic_rotate %33 by %c255_i32 dim 1 : vector<32x256xf32>, i32 -> vector<32x256xf32>
    %84 = vector.broadcast %45 : vector<32x1xf32> to vector<32x256xf32>
    %85 = arith.mulf %83, %84 : vector<32x256xf32>
    %86 = vector.broadcast %12 : vector<1x256xf32> to vector<32x256xf32>
    %87 = arith.mulf %85, %86 : vector<32x256xf32>
    %88 = arith.addf %82, %87 : vector<32x256xf32>
    %89 = arith.addf %72, %88 : vector<32x256xf32>
    %cst_33 = arith.constant 0.000000e+00 : f32
    %90 = vector.broadcast %cst_33 : f32 to vector<32x256xf32>
    %c241_i32 = arith.constant 241 : i32
    %91 = tpu.dynamic_rotate %33 by %c241_i32 dim 1 : vector<32x256xf32>, i32 -> vector<32x256xf32>
    %92 = vector.broadcast %47 : vector<32x1xf32> to vector<32x256xf32>
    %93 = arith.mulf %91, %92 : vector<32x256xf32>
    %94 = vector.broadcast %8 : vector<1x256xf32> to vector<32x256xf32>
    %95 = arith.mulf %93, %94 : vector<32x256xf32>
    %96 = arith.addf %90, %95 : vector<32x256xf32>
    %c240_i32 = arith.constant 240 : i32
    %97 = tpu.dynamic_rotate %33 by %c240_i32 dim 1 : vector<32x256xf32>, i32 -> vector<32x256xf32>
    %98 = vector.broadcast %49 : vector<32x1xf32> to vector<32x256xf32>
    %99 = arith.mulf %97, %98 : vector<32x256xf32>
    %100 = arith.addf %96, %99 : vector<32x256xf32>
    %c239_i32 = arith.constant 239 : i32
    %101 = tpu.dynamic_rotate %33 by %c239_i32 dim 1 : vector<32x256xf32>, i32 -> vector<32x256xf32>
    %102 = vector.broadcast %51 : vector<32x1xf32> to vector<32x256xf32>
    %103 = arith.mulf %101, %102 : vector<32x256xf32>
    %104 = vector.broadcast %12 : vector<1x256xf32> to vector<32x256xf32>
    %105 = arith.mulf %103, %104 : vector<32x256xf32>
    %106 = arith.addf %100, %105 : vector<32x256xf32>
    %107 = vector.broadcast %20 : vector<1x256xf32> to vector<32x256xf32>
    %108 = arith.mulf %106, %107 : vector<32x256xf32>
    %109 = arith.addf %89, %108 : vector<32x256xf32>
    %c0_34 = arith.constant 0 : index
    %c0_35 = arith.constant 0 : index
    %110 = vector.load %arg5[%c0_34, %c0_35] : memref<32x1xf32, #tpu.memory_space<vmem>>, vector<32x1xf32>
    %111 = vector.broadcast %110 : vector<32x1xf32> to vector<32x256xf32>
    %112 = arith.addf %109, %111 : vector<32x256xf32>
    %cst_36 = arith.constant 0.000000e+00 : f32
    %113 = vector.broadcast %cst_36 : f32 to vector<32x256xf32>
    %114 = arith.subf %113, %112 : vector<32x256xf32>
    %115 = math.exp %114 : vector<32x256xf32>
    %cst_37 = arith.constant 1.000000e+00 : f32
    %116 = vector.broadcast %cst_37 : f32 to vector<32x256xf32>
    %117 = arith.addf %116, %115 : vector<32x256xf32>
    %118 = tpu.reciprocal %117 : vector<32x256xf32> -> vector<32x256xf32>
    %119 = arith.mulf %112, %118 : vector<32x256xf32>
    %c0_38 = arith.constant 0 : index
    %c0_39 = arith.constant 0 : index
    %120 = vector.load %arg6[%c0_38, %c0_39] : memref<8x32xf32, #tpu.memory_space<vmem>>, vector<8x32xf32>
    %cst_40 = arith.constant dense<0.000000e+00> : vector<8x256xf32>
    %121 = tpu.matmul %120, %119, %cst_40 {dimension_numbers = #tpu.dot_dimension_numbers<[1], [0], [0], [1], [0, 0, 1, 1], [], []>} : vector<8x32xf32>, vector<32x256xf32>, vector<8x256xf32> -> vector<8x256xf32>
    %c0_41 = arith.constant 0 : index
    %c0_42 = arith.constant 0 : index
    %122 = vector.load %arg7[%c0_41, %c0_42] : memref<8x1xf32, #tpu.memory_space<vmem>>, vector<8x1xf32>
    %123 = vector.broadcast %122 : vector<8x1xf32> to vector<8x256xf32>
    %124 = arith.addf %121, %123 : vector<8x256xf32>
    %125 = arith.addf %124, %21 : vector<8x256xf32>
    %c0_43 = arith.constant 0 : index
    %c0_44 = arith.constant 0 : index
    %126 = vector.load %arg8[%c0_43, %c0_44] : memref<8x256xf32, #tpu.memory_space<vmem>>, vector<8x256xf32>
    tpu.vector_store %arg8[%c0_43, %c0_44], %125 {strides = array<i32>} : memref<8x256xf32, #tpu.memory_space<vmem>>, vector<8x256xf32>,
    return
  }
  func.func @transform_0(%arg0: i32) -> (i32, i32) {
    %c0_i32 = arith.constant 0 : i32
    %c0_i32_0 = arith.constant 0 : i32
    %c0_i32_1 = arith.constant 0 : i32
    return %c0_i32, %c0_i32_0 : i32, i32
  }
  func.func @transform_1(%arg0: i32) -> (i32, i32) {
    %c0_i32 = arith.constant 0 : i32
    %c0_i32_0 = arith.constant 0 : i32
    %c0_i32_1 = arith.constant 0 : i32
    return %c0_i32, %c0_i32_0 : i32, i32
  }
  func.func @transform_2(%arg0: i32) -> (i32, i32) {
    %c0_i32 = arith.constant 0 : i32
    %c0_i32_0 = arith.constant 0 : i32
    %c0_i32_1 = arith.constant 0 : i32
    return %c0_i32, %c0_i32_0 : i32, i32
  }
  func.func @transform_3(%arg0: i32) -> (i32, i32, i32) {
    %c0_i32 = arith.constant 0 : i32
    %c0_i32_0 = arith.constant 0 : i32
    %c0_i32_1 = arith.constant 0 : i32
    %c0_i32_2 = arith.constant 0 : i32
    return %c0_i32, %c0_i32_0, %c0_i32_1 : i32, i32, i32
  }
  func.func @transform_4(%arg0: i32) -> (i32, i32) {
    %c0_i32 = arith.constant 0 : i32
    %c0_i32_0 = arith.constant 0 : i32
    %c0_i32_1 = arith.constant 0 : i32
    return %c0_i32, %c0_i32_0 : i32, i32
  }
  func.func @transform_5(%arg0: i32) -> (i32, i32) {
    %c0_i32 = arith.constant 0 : i32
    %c0_i32_0 = arith.constant 0 : i32
    %c0_i32_1 = arith.constant 0 : i32
    return %c0_i32, %c0_i32_0 : i32, i32
  }
  func.func @transform_6(%arg0: i32) -> (i32, i32) {
    %c0_i32 = arith.constant 0 : i32
    %c0_i32_0 = arith.constant 0 : i32
    %c0_i32_1 = arith.constant 0 : i32
    return %c0_i32, %c0_i32_0 : i32, i32
  }
  func.func @transform_7(%arg0: i32) -> (i32, i32) {
    %c0_i32 = arith.constant 0 : i32
    %c0_i32_0 = arith.constant 0 : i32
    %c0_i32_1 = arith.constant 0 : i32
    return %c0_i32, %c0_i32_0 : i32, i32
  }
}

</mosaic_0001>

<llo_original>
// kernel: tpu_custom_call.1
$region0: #{tpu_custom_call.1}
  #allocation0 [shape = 'u32[]', space=smem, size = 0x4, offset = 0x4, fixed_abs, tag = 'smem constant byte address 0x4 - core index']
  #allocation1 [shape = 'u32[72,128]{1,0:T(1,128)}', space=vmem, size = 0x9000, scoped, tag = 'internal scratch']
  %s0 = inlined_call_operand.vmem [shape: f32[8,256], index: 0, kind: input, shape index: {}]
  %s1 = inlined_call_operand.vmem [shape: f32[32,8], index: 1, kind: input, shape index: {}]
  %s2 = inlined_call_operand.vmem [shape: f32[32,1], index: 2, kind: input, shape index: {}]
  %s3 = inlined_call_operand.vmem [shape: f32[9,32,1], index: 3, kind: input, shape index: {}]
  %s4 = inlined_call_operand.vmem [shape: f32[32,1], index: 4, kind: input, shape index: {}]
  %s5 = inlined_call_operand.vmem [shape: f32[8,32], index: 5, kind: input, shape index: {}]
  %s6 = inlined_call_operand.vmem [shape: f32[8,1], index: 6, kind: input, shape index: {}]
  %s7 = inlined_call_operand.hbm [shape: f32[8,256], index: 7, kind: output, shape index: {}]
  %s8 = sld [smem:[#allocation0]]
  $region38: #{tpu_custom_call.1} parent=0
    _
  %s10 = ssub.s32 1, %s8
  %s11 = scalar_select 0, %s10, %s8
  $region1: #{tpu_custom_call.1} parent=0
    #allocation2 [shape = 'u8[8192]{0}', space=vmem, size = 0x2000, scoped, tag = 'output window, operand 0, single buffered']
    #allocation3 [shape = 's32[1]{0}', space=sflag, size = 0x4, scoped, tag = 'scoped memory for tpu_custom_call.1']
    %12 = vsyncpa [#allocation3], 0
    // Predicated region
    $region2: #{tpu_custom_call.1} parent=1 // pred_check
      _
    $region3: #{tpu_custom_call.1} parent=1 // pred_check_branch
      %14 = sbr.rel (0) target = $region5
    $region4: #{tpu_custom_call.1} parent=1 // pred_region
      _
    $region5: #{tpu_custom_call.1} parent=1 // pred_fallthru
      _
    // Predicated region
    $region6: #{tpu_custom_call.1} parent=1 // pred_check
      _
    $region7: #{tpu_custom_call.1} parent=1 // pred_check_branch
      %16 = sbr.rel (0) target = $region9
    $region8: #{tpu_custom_call.1} parent=1 // pred_region
      _
    $region9: #{tpu_custom_call.1} parent=1 // pred_fallthru
      _
    // Predicated region
    $region10: #{tpu_custom_call.1} parent=1 // pred_check
      _
    $region11: #{tpu_custom_call.1} parent=1 // pred_check_branch
      %18 = sbr.rel (0) target = $region13
    $region12: #{tpu_custom_call.1} parent=1 // pred_region
      _
    $region13: #{tpu_custom_call.1} parent=1 // pred_fallthru
      _
    // Predicated region
    $region14: #{tpu_custom_call.1} parent=1 // pred_check
      _
    $region15: #{tpu_custom_call.1} parent=1 // pred_check_branch
      %20 = sbr.rel (0) target = $region17
    $region16: #{tpu_custom_call.1} parent=1 // pred_region
      _
    $region17: #{tpu_custom_call.1} parent=1 // pred_fallthru
      _
    // Predicated region
    $region18: #{tpu_custom_call.1} parent=1 // pred_check
      _
    $region19: #{tpu_custom_call.1} parent=1 // pred_check_branch
      %22 = sbr.rel (0) target = $region21
    $region20: #{tpu_custom_call.1} parent=1 // pred_region
      _
    $region21: #{tpu_custom_call.1} parent=1 // pred_fallthru
      _
    // Predicated region
    $region22: #{tpu_custom_call.1} parent=1 // pred_check
      _
    $region23: #{tpu_custom_call.1} parent=1 // pred_check_branch
      %24 = sbr.rel (0) target = $region25
    $region24: #{tpu_custom_call.1} parent=1 // pred_region
      _
    $region25: #{tpu_custom_call.1} parent=1 // pred_fallthru
      _
    // Predicated region
    $region26: #{tpu_custom_call.1} parent=1 // pred_check
      _
    $region27: #{tpu_custom_call.1} parent=1 // pred_check_branch
      %26 = sbr.rel (0) target = $region29
    $region28: #{tpu_custom_call.1} parent=1 // pred_region
      _
    $region29: #{tpu_custom_call.1} parent=1 // pred_fallthru
      _
    %v27 = vlaneseq
    %v28 = vand.u32 %v27, 127
    %v29 = vadd.s32 %v28, 128
    %v30 = vand.u32 %v28, 15
    %v31 = vand.u32 %v29, 15
    %v32 = vshra.s32 %v28, 4
    %v33 = vshra.s32 %v29, 4
    %vm34 = vcmp.ge.s32.totalorder %v30, 1
    %vm35 = vcmp.ge.s32.totalorder %v31, 1
    %v36 = vsel %vm34, 1, 0
    %v37 = vsel %vm35, 1, 0
    %v38 = vcvt.s32.f32 %v36
    %v39 = vcvt.s32.f32 %v37
    %vm40 = vcmp.le.s32.totalorder %v30, 14
    %vm41 = vcmp.le.s32.totalorder %v31, 14
    %v42 = vsel %vm40, 1, 0
    %v43 = vsel %vm41, 1, 0
    %v44 = vcvt.s32.f32 %v42
    %v45 = vcvt.s32.f32 %v43
    %vm46 = vcmp.ge.s32.totalorder %v32, 1
    %vm47 = vcmp.ge.s32.totalorder %v33, 1
    %v48 = vsel %vm46, 1, 0
    %v49 = vsel %vm47, 1, 0
    %v50 = vcvt.s32.f32 %v48
    %v51 = vcvt.s32.f32 %v49
    %vm52 = vcmp.le.s32.totalorder %v32, 14
    %vm53 = vcmp.le.s32.totalorder %v33, 14
    %v54 = vsel %vm52, 1, 0
    %v55 = vsel %vm53, 1, 0
    %v56 = vcvt.s32.f32 %v54
    %v57 = vcvt.s32.f32 %v55
    %v58 = vld [vmem:[%s0] sm:$0xff]
    %v59 = vld [vmem:[%s0 + $0x8] sm:$0xff]
    %v60 = vld [vmem:[%s1] sm:$0xff]
    %v61 = vld [vmem:[%s1 + $0x8] sm:$0xff]
    %v62 = vld [vmem:[%s1 + $0x10] sm:$0xff]
    %v63 = vld [vmem:[%s1 + $0x18] sm:$0xff]
    %v64 = vld [vmem:[%s2] sm:$0xff]
    %v65 = vld [vmem:[%s2 + $0x8] sm:$0xff]
    %v66 = vld [vmem:[%s2 + $0x10] sm:$0xff]
    %v67 = vld [vmem:[%s2 + $0x18] sm:$0xff]
    %69 = vset.pattern.permute.xlu0 0
    %70 = vperm.xlu0 %69, %v64
    %v71 = vpop.permute.xlu0 %70
    %74 = vset.pattern.permute.xlu0 0
    %75 = vperm.xlu0 %74, %v65
    %v76 = vpop.permute.xlu0 %75
    %79 = vset.pattern.permute.xlu0 0
    %80 = vperm.xlu0 %79, %v66
    %v81 = vpop.permute.xlu0 %80
    %84 = vset.pattern.permute.xlu0 0
    %85 = vperm.xlu0 %84, %v67
    %v86 = vpop.permute.xlu0 %85
    %vm88 = vcmask 64512
    %v90 = vsel %vm88, %v60, 0
    %v93 = vsel %vm88, %v61, 0
    %v96 = vsel %vm88, %v62, 0
    %v99 = vsel %vm88, %v63, 0
    %101 = vmatpush.msra.mxu0 0.0
    %102 = vmatpush.msra.mxu0 0.0
    %103 = vmatpush.msra.mxu0 0.0
    %104 = vmatpush.msra.mxu0 0.0
    %105 = vmatpush.msra.mxu0 0.0
    %106 = vmatpush.msra.mxu0 0.0
    %107 = vmatpush.msra.mxu0 0.0
    %108 = vmatpush.msra.mxu0 0.0
    %109 = vmatpush.msra.mxu0 0.0
    %110 = vmatpush.msra.mxu0 0.0
    %111 = vmatpush.msra.mxu0 0.0
    %112 = vmatpush.msra.mxu0 0.0
    %113 = vmatpush.msra.mxu0 0.0
    %114 = vmatpush.msra.mxu0 0.0
    %115 = vmatpush.msra.mxu0 0.0
    %116 = vmatpush.msra.mxu0 %v58
    %117 = vmatmul.f32.gmra.mxu0 %v90
    %v118 = vpop.f32.mrf.mxu0
    %v119 = vadd.f32 %v71, %v118
    %120 = vmatmul.f32.gmra.mxu0 %v93
    %v121 = vpop.f32.mrf.mxu0
    %v122 = vadd.f32 %v76, %v121
    %123 = vmatmul.f32.gmra.mxu0 %v96
    %v124 = vpop.f32.mrf.mxu0
    %v125 = vadd.f32 %v81, %v124
    %126 = vmatmul.f32.gmra.mxu0 %v99
    %v127 = vpop.f32.mrf.mxu0
    %v128 = vadd.f32 %v86, %v127
    %129 = vdwg.mxu0
    %130 = vmatpush.msra.mxu0 0.0
    %131 = vmatpush.msra.mxu0 0.0
    %132 = vmatpush.msra.mxu0 0.0
    %133 = vmatpush.msra.mxu0 0.0
    %134 = vmatpush.msra.mxu0 0.0
    %135 = vmatpush.msra.mxu0 0.0
    %136 = vmatpush.msra.mxu0 0.0
    %137 = vmatpush.msra.mxu0 0.0
    %138 = vmatpush.msra.mxu0 0.0
    %139 = vmatpush.msra.mxu0 0.0
    %140 = vmatpush.msra.mxu0 0.0
    %141 = vmatpush.msra.mxu0 0.0
    %142 = vmatpush.msra.mxu0 0.0
    %143 = vmatpush.msra.mxu0 0.0
    %144 = vmatpush.msra.mxu0 0.0
    %145 = vmatpush.msra.mxu0 %v59
    %146 = vmatmul.f32.gmra.mxu0 %v90
    %v147 = vpop.f32.mrf.mxu0
    %v148 = vadd.f32 %v71, %v147
    %149 = vmatmul.f32.gmra.mxu0 %v93
    %v150 = vpop.f32.mrf.mxu0
    %v151 = vadd.f32 %v76, %v150
    %152 = vmatmul.f32.gmra.mxu0 %v96
    %v153 = vpop.f32.mrf.mxu0
    %v154 = vadd.f32 %v81, %v153
    %155 = vmatmul.f32.gmra.mxu0 %v99
    %v156 = vpop.f32.mrf.mxu0
    %v157 = vadd.f32 %v86, %v156
    %158 = vdwg.mxu0
    %v159 = vsub.f32 0.0, %v119
    %v160 = vsub.f32 0.0, %v148
    %v161 = vsub.f32 0.0, %v122
    %v162 = vsub.f32 0.0, %v151
    %v163 = vsub.f32 0.0, %v125
    %v164 = vsub.f32 0.0, %v154
    %v165 = vsub.f32 0.0, %v128
    %v166 = vsub.f32 0.0, %v157
    %v167 = vmul.f32 %v159, 1.442695
    %v168 = vpow.pop %v167
    %v169 = vmul.f32 %v160, 1.442695
    %v170 = vpow.pop %v169
    %v171 = vmul.f32 %v161, 1.442695
    %v172 = vpow.pop %v171
    %v173 = vmul.f32 %v162, 1.442695
    %v174 = vpow.pop %v173
    %v175 = vmul.f32 %v163, 1.442695
    %v176 = vpow.pop %v175
    %v177 = vmul.f32 %v164, 1.442695
    %v178 = vpow.pop %v177
    %v179 = vmul.f32 %v165, 1.442695
    %v180 = vpow.pop %v179
    %v181 = vmul.f32 %v166, 1.442695
    %v182 = vpow.pop %v181
    %v183 = vadd.f32 %v168, 1.0
    %v184 = vadd.f32 %v170, 1.0
    %v185 = vadd.f32 %v172, 1.0
    %v186 = vadd.f32 %v174, 1.0
    %v187 = vadd.f32 %v176, 1.0
    %v188 = vadd.f32 %v178, 1.0
    %v189 = vadd.f32 %v180, 1.0
    %v190 = vadd.f32 %v182, 1.0
    %v191 = vrcp.pop %v183
    %v192 = vmul.f32 %v183, %v191
    %v193 = vsub.f32 1.0, %v192
    %v194 = vmul.f32 %v191, %v193
    %v195 = vadd.f32 %v191, %v194
    %vm196 = vweird.f32 %v183
    %vm197 = vweird.f32 %v191
    %vm198 = vmor %vm196, %vm197
    %v199 = vsel %vm198, %v191, %v195
    %v200 = vand.u32 2147483647, %v183
    %vm201 = vcmp.eq.f32.partialorder %v200, 8.507059e+37
    %v202 = vand.u32 %v183, 2147483648
    %v203 = vor.u32 1.1754944e-38, %v202
    %v204 = vsel %vm201, %v203, %v199
    %v205 = vrcp.pop %v184
    %v206 = vmul.f32 %v184, %v205
    %v207 = vsub.f32 1.0, %v206
    %v208 = vmul.f32 %v205, %v207
    %v209 = vadd.f32 %v205, %v208
    %vm210 = vweird.f32 %v184
    %vm211 = vweird.f32 %v205
    %vm212 = vmor %vm210, %vm211
    %v213 = vsel %vm212, %v205, %v209
    %v214 = vand.u32 2147483647, %v184
    %vm215 = vcmp.eq.f32.partialorder %v214, 8.507059e+37
    %v216 = vand.u32 %v184, 2147483648
    %v217 = vor.u32 1.1754944e-38, %v216
    %v218 = vsel %vm215, %v217, %v213
    %v219 = vrcp.pop %v185
    %v220 = vmul.f32 %v185, %v219
    %v221 = vsub.f32 1.0, %v220
    %v222 = vmul.f32 %v219, %v221
    %v223 = vadd.f32 %v219, %v222
    %vm224 = vweird.f32 %v185
    %vm225 = vweird.f32 %v219
    %vm226 = vmor %vm224, %vm225
    %v227 = vsel %vm226, %v219, %v223
    %v228 = vand.u32 2147483647, %v185
    %vm229 = vcmp.eq.f32.partialorder %v228, 8.507059e+37
    %v230 = vand.u32 %v185, 2147483648
    %v231 = vor.u32 1.1754944e-38, %v230
    %v232 = vsel %vm229, %v231, %v227
    %v233 = vrcp.pop %v186
    %v234 = vmul.f32 %v186, %v233
    %v235 = vsub.f32 1.0, %v234
    %v236 = vmul.f32 %v233, %v235
    %v237 = vadd.f32 %v233, %v236
    %vm238 = vweird.f32 %v186
    %vm239 = vweird.f32 %v233
    %vm240 = vmor %vm238, %vm239
    %v241 = vsel %vm240, %v233, %v237
    %v242 = vand.u32 2147483647, %v186
    %vm243 = vcmp.eq.f32.partialorder %v242, 8.507059e+37
    %v244 = vand.u32 %v186, 2147483648
    %v245 = vor.u32 1.1754944e-38, %v244
    %v246 = vsel %vm243, %v245, %v241
    %v247 = vrcp.pop %v187
    %v248 = vmul.f32 %v187, %v247
    %v249 = vsub.f32 1.0, %v248
    %v250 = vmul.f32 %v247, %v249
    %v251 = vadd.f32 %v247, %v250
    %vm252 = vweird.f32 %v187
    %vm253 = vweird.f32 %v247
    %vm254 = vmor %vm252, %vm253
    %v255 = vsel %vm254, %v247, %v251
    %v256 = vand.u32 2147483647, %v187
    %vm257 = vcmp.eq.f32.partialorder %v256, 8.507059e+37
    %v258 = vand.u32 %v187, 2147483648
    %v259 = vor.u32 1.1754944e-38, %v258
    %v260 = vsel %vm257, %v259, %v255
    %v261 = vrcp.pop %v188
    %v262 = vmul.f32 %v188, %v261
    %v263 = vsub.f32 1.0, %v262
    %v264 = vmul.f32 %v261, %v263
    %v265 = vadd.f32 %v261, %v264
    %vm266 = vweird.f32 %v188
    %vm267 = vweird.f32 %v261
    %vm268 = vmor %vm266, %vm267
    %v269 = vsel %vm268, %v261, %v265
    %v270 = vand.u32 2147483647, %v188
    %vm271 = vcmp.eq.f32.partialorder %v270, 8.507059e+37
    %v272 = vand.u32 %v188, 2147483648
    %v273 = vor.u32 1.1754944e-38, %v272
    %v274 = vsel %vm271, %v273, %v269
    %v275 = vrcp.pop %v189
    %v276 = vmul.f32 %v189, %v275
    %v277 = vsub.f32 1.0, %v276
    %v278 = vmul.f32 %v275, %v277
    %v279 = vadd.f32 %v275, %v278
    %vm280 = vweird.f32 %v189
    %vm281 = vweird.f32 %v275
    %vm282 = vmor %vm280, %vm281
    %v283 = vsel %vm282, %v275, %v279
    %v284 = vand.u32 2147483647, %v189
    %vm285 = vcmp.eq.f32.partialorder %v284, 8.507059e+37
    %v286 = vand.u32 %v189, 2147483648
    %v287 = vor.u32 1.1754944e-38, %v286
    %v288 = vsel %vm285, %v287, %v283
    %v289 = vrcp.pop %v190
    %v290 = vmul.f32 %v190, %v289
    %v291 = vsub.f32 1.0, %v290
    %v292 = vmul.f32 %v289, %v291
    %v293 = vadd.f32 %v289, %v292
    %vm294 = vweird.f32 %v190
    %vm295 = vweird.f32 %v289
    %vm296 = vmor %vm294, %vm295
    %v297 = vsel %vm296, %v289, %v293
    %v298 = vand.u32 2147483647, %v190
    %vm299 = vcmp.eq.f32.partialorder %v298, 8.507059e+37
    %v300 = vand.u32 %v190, 2147483648
    %v301 = vor.u32 1.1754944e-38, %v300
    %v302 = vsel %vm299, %v301, %v297
    %v303 = vmul.f32 %v119, %v204
    %v304 = vmul.f32 %v148, %v218
    %v305 = vmul.f32 %v122, %v232
    %v306 = vmul.f32 %v151, %v246
    %v307 = vmul.f32 %v125, %v260
    %v308 = vmul.f32 %v154, %v274
    %v309 = vmul.f32 %v128, %v288
    %v310 = vmul.f32 %v157, %v302
    %v311 = vld [vmem:[%s3] sm:$0xff]
    %v312 = vld [vmem:[%s3 + $0x8] sm:$0xff]
    %v313 = vld [vmem:[%s3 + $0x10] sm:$0xff]
    %v314 = vld [vmem:[%s3 + $0x18] sm:$0xff]
    %s315 = scalar_lea.vmem %s3, 32
    %v316 = vld [vmem:[%s315] sm:$0xff]
    %v317 = vld [vmem:[%s315 + $0x8] sm:$0xff]
    %v318 = vld [vmem:[%s315 + $0x10] sm:$0xff]
    %v319 = vld [vmem:[%s315 + $0x18] sm:$0xff]
    %s320 = scalar_lea.vmem %s3, 64
    %v321 = vld [vmem:[%s320] sm:$0xff]
    %v322 = vld [vmem:[%s320 + $0x8] sm:$0xff]
    %v323 = vld [vmem:[%s320 + $0x10] sm:$0xff]
    %v324 = vld [vmem:[%s320 + $0x18] sm:$0xff]
    %s325 = scalar_lea.vmem %s3, 96
    %v326 = vld [vmem:[%s325] sm:$0xff]
    %v327 = vld [vmem:[%s325 + $0x8] sm:$0xff]
    %v328 = vld [vmem:[%s325 + $0x10] sm:$0xff]
    %v329 = vld [vmem:[%s325 + $0x18] sm:$0xff]
    %s330 = scalar_lea.vmem %s3, 128
    %v331 = vld [vmem:[%s330] sm:$0xff]
    %v332 = vld [vmem:[%s330 + $0x8] sm:$0xff]
    %v333 = vld [vmem:[%s330 + $0x10] sm:$0xff]
    %v334 = vld [vmem:[%s330 + $0x18] sm:$0xff]
    %s335 = scalar_lea.vmem %s3, 160
    %v336 = vld [vmem:[%s335] sm:$0xff]
    %v337 = vld [vmem:[%s335 + $0x8] sm:$0xff]
    %v338 = vld [vmem:[%s335 + $0x10] sm:$0xff]
    %v339 = vld [vmem:[%s335 + $0x18] sm:$0xff]
    %s340 = scalar_lea.vmem %s3, 192
    %v341 = vld [vmem:[%s340] sm:$0xff]
    %v342 = vld [vmem:[%s340 + $0x8] sm:$0xff]
    %v343 = vld [vmem:[%s340 + $0x10] sm:$0xff]
    %v344 = vld [vmem:[%s340 + $0x18] sm:$0xff]
    %s345 = scalar_lea.vmem %s3, 224
    %v346 = vld [vmem:[%s345] sm:$0xff]
    %v347 = vld [vmem:[%s345 + $0x8] sm:$0xff]
    %v348 = vld [vmem:[%s345 + $0x10] sm:$0xff]
    %v349 = vld [vmem:[%s345 + $0x18] sm:$0xff]
    %s350 = scalar_lea.vmem %s3, 256
    %v351 = vld [vmem:[%s350] sm:$0xff]
    %v352 = vld [vmem:[%s350 + $0x8] sm:$0xff]
    %v353 = vld [vmem:[%s350 + $0x10] sm:$0xff]
    %v354 = vld [vmem:[%s350 + $0x18] sm:$0xff]
    %355 = vrot.lane.b32.xlu0 %v303, 17
    %v356 = vpop.permute.xlu0 %355
    %357 = vrot.lane.b32.xlu0 %v305, 17
    %v358 = vpop.permute.xlu0 %357
    %359 = vrot.lane.b32.xlu0 %v307, 17
    %v360 = vpop.permute.xlu0 %359
    %361 = vrot.lane.b32.xlu0 %v309, 17
    %v362 = vpop.permute.xlu0 %361
    %363 = vrot.lane.b32.xlu0 %v304, 17
    %v364 = vpop.permute.xlu0 %363
    %365 = vrot.lane.b32.xlu0 %v306, 17
    %v366 = vpop.permute.xlu0 %365
    %367 = vrot.lane.b32.xlu0 %v308, 17
    %v368 = vpop.permute.xlu0 %367
    %369 = vrot.lane.b32.xlu0 %v310, 17
    %v370 = vpop.permute.xlu0 %369
    %vm371 = vcmp.lt.s32.totalorder %v28, 17
    %v372 = vsel %vm371, %v356, %v364
    %v373 = vsel %vm371, %v358, %v366
    %v374 = vsel %vm371, %v360, %v368
    %v375 = vsel %vm371, %v362, %v370
    %v376 = vsel %vm371, %v364, %v356
    %v377 = vsel %vm371, %v366, %v358
    %v378 = vsel %vm371, %v368, %v360
    %v379 = vsel %vm371, %v370, %v362
    %381 = vset.pattern.permute.xlu0 0
    %382 = vperm.xlu0 %381, %v311
    %v383 = vpop.permute.xlu0 %382
    %386 = vset.pattern.permute.xlu0 0
    %387 = vperm.xlu0 %386, %v312
    %v388 = vpop.permute.xlu0 %387
    %391 = vset.pattern.permute.xlu0 0
    %392 = vperm.xlu0 %391, %v313
    %v393 = vpop.permute.xlu0 %392
    %396 = vset.pattern.permute.xlu0 0
    %397 = vperm.xlu0 %396, %v314
    %v398 = vpop.permute.xlu0 %397
    %v400 = vmul.f32 %v376, %v383
    %v401 = vmul.f32 %v372, %v383
    %v402 = vmul.f32 %v377, %v388
    %v403 = vmul.f32 %v373, %v388
    %v404 = vmul.f32 %v378, %v393
    %v405 = vmul.f32 %v374, %v393
    %v406 = vmul.f32 %v379, %v398
    %v407 = vmul.f32 %v375, %v398
    %v408 = vmul.f32 %v400, %v38
    %v409 = vmul.f32 %v401, %v39
    %v410 = vmul.f32 %v402, %v38
    %v411 = vmul.f32 %v403, %v39
    %v412 = vmul.f32 %v404, %v38
    %v413 = vmul.f32 %v405, %v39
    %v414 = vmul.f32 %v406, %v38
    %v415 = vmul.f32 %v407, %v39
    %v416 = vadd.f32 %v408, 0.0
    %v417 = vadd.f32 %v409, 0.0
    %v418 = vadd.f32 %v410, 0.0
    %v419 = vadd.f32 %v411, 0.0
    %v420 = vadd.f32 %v412, 0.0
    %v421 = vadd.f32 %v413, 0.0
    %v422 = vadd.f32 %v414, 0.0
    %v423 = vadd.f32 %v415, 0.0
    %424 = vrot.lane.b32.xlu0 %v303, 16
    %v425 = vpop.permute.xlu0 %424
    %426 = vrot.lane.b32.xlu0 %v305, 16
    %v427 = vpop.permute.xlu0 %426
    %428 = vrot.lane.b32.xlu0 %v307, 16
    %v429 = vpop.permute.xlu0 %428
    %430 = vrot.lane.b32.xlu0 %v309, 16
    %v431 = vpop.permute.xlu0 %430
    %432 = vrot.lane.b32.xlu0 %v304, 16
    %v433 = vpop.permute.xlu0 %432
    %434 = vrot.lane.b32.xlu0 %v306, 16
    %v435 = vpop.permute.xlu0 %434
    %436 = vrot.lane.b32.xlu0 %v308, 16
    %v437 = vpop.permute.xlu0 %436
    %438 = vrot.lane.b32.xlu0 %v310, 16
    %v439 = vpop.permute.xlu0 %438
    %vm440 = vcmp.lt.s32.totalorder %v28, 16
    %v441 = vsel %vm440, %v425, %v433
    %v442 = vsel %vm440, %v427, %v435
    %v443 = vsel %vm440, %v429, %v437
    %v444 = vsel %vm440, %v431, %v439
    %v445 = vsel %vm440, %v433, %v425
    %v446 = vsel %vm440, %v435, %v427
    %v447 = vsel %vm440, %v437, %v429
    %v448 = vsel %vm440, %v439, %v431
    %450 = vset.pattern.permute.xlu0 0
    %451 = vperm.xlu0 %450, %v316
    %v452 = vpop.permute.xlu0 %451
    %455 = vset.pattern.permute.xlu0 0
    %456 = vperm.xlu0 %455, %v317
    %v457 = vpop.permute.xlu0 %456
    %460 = vset.pattern.permute.xlu0 0
    %461 = vperm.xlu0 %460, %v318
    %v462 = vpop.permute.xlu0 %461
    %465 = vset.pattern.permute.xlu0 0
    %466 = vperm.xlu0 %465, %v319
    %v467 = vpop.permute.xlu0 %466
    %v469 = vmul.f32 %v445, %v452
    %v470 = vmul.f32 %v441, %v452
    %v471 = vmul.f32 %v446, %v457
    %v472 = vmul.f32 %v442, %v457
    %v473 = vmul.f32 %v447, %v462
    %v474 = vmul.f32 %v443, %v462
    %v475 = vmul.f32 %v448, %v467
    %v476 = vmul.f32 %v444, %v467
    %v477 = vadd.f32 %v416, %v469
    %v478 = vadd.f32 %v417, %v470
    %v479 = vadd.f32 %v418, %v471
    %v480 = vadd.f32 %v419, %v472
    %v481 = vadd.f32 %v420, %v473
    %v482 = vadd.f32 %v421, %v474
    %v483 = vadd.f32 %v422, %v475
    %v484 = vadd.f32 %v423, %v476
    %485 = vrot.lane.b32.xlu0 %v303, 15
    %v486 = vpop.permute.xlu0 %485
    %487 = vrot.lane.b32.xlu0 %v305, 15
    %v488 = vpop.permute.xlu0 %487
    %489 = vrot.lane.b32.xlu0 %v307, 15
    %v490 = vpop.permute.xlu0 %489
    %491 = vrot.lane.b32.xlu0 %v309, 15
    %v492 = vpop.permute.xlu0 %491
    %493 = vrot.lane.b32.xlu0 %v304, 15
    %v494 = vpop.permute.xlu0 %493
    %495 = vrot.lane.b32.xlu0 %v306, 15
    %v496 = vpop.permute.xlu0 %495
    %497 = vrot.lane.b32.xlu0 %v308, 15
    %v498 = vpop.permute.xlu0 %497
    %499 = vrot.lane.b32.xlu0 %v310, 15
    %v500 = vpop.permute.xlu0 %499
    %vm501 = vcmp.lt.s32.totalorder %v28, 15
    %v502 = vsel %vm501, %v486, %v494
    %v503 = vsel %vm501, %v488, %v496
    %v504 = vsel %vm501, %v490, %v498
    %v505 = vsel %vm501, %v492, %v500
    %v506 = vsel %vm501, %v494, %v486
    %v507 = vsel %vm501, %v496, %v488
    %v508 = vsel %vm501, %v498, %v490
    %v509 = vsel %vm501, %v500, %v492
    %511 = vset.pattern.permute.xlu0 0
    %512 = vperm.xlu0 %511, %v321
    %v513 = vpop.permute.xlu0 %512
    %516 = vset.pattern.permute.xlu0 0
    %517 = vperm.xlu0 %516, %v322
    %v518 = vpop.permute.xlu0 %517
    %521 = vset.pattern.permute.xlu0 0
    %522 = vperm.xlu0 %521, %v323
    %v523 = vpop.permute.xlu0 %522
    %526 = vset.pattern.permute.xlu0 0
    %527 = vperm.xlu0 %526, %v324
    %v528 = vpop.permute.xlu0 %527
    %v530 = vmul.f32 %v506, %v513
    %v531 = vmul.f32 %v502, %v513
    %v532 = vmul.f32 %v507, %v518
    %v533 = vmul.f32 %v503, %v518
    %v534 = vmul.f32 %v508, %v523
    %v535 = vmul.f32 %v504, %v523
    %v536 = vmul.f32 %v509, %v528
    %v537 = vmul.f32 %v505, %v528
    %v538 = vmul.f32 %v530, %v44
    %v539 = vmul.f32 %v531, %v45
    %v540 = vmul.f32 %v532, %v44
    %v541 = vmul.f32 %v533, %v45
    %v542 = vmul.f32 %v534, %v44
    %v543 = vmul.f32 %v535, %v45
    %v544 = vmul.f32 %v536, %v44
    %v545 = vmul.f32 %v537, %v45
    %v546 = vadd.f32 %v477, %v538
    %v547 = vadd.f32 %v478, %v539
    %v548 = vadd.f32 %v479, %v540
    %v549 = vadd.f32 %v480, %v541
    %v550 = vadd.f32 %v481, %v542
    %v551 = vadd.f32 %v482, %v543
    %v552 = vadd.f32 %v483, %v544
    %v553 = vadd.f32 %v484, %v545
    %v554 = vmul.f32 %v546, %v50
    %v555 = vmul.f32 %v547, %v51
    %v556 = vmul.f32 %v548, %v50
    %v557 = vmul.f32 %v549, %v51
    %v558 = vmul.f32 %v550, %v50
    %v559 = vmul.f32 %v551, %v51
    %v560 = vmul.f32 %v552, %v50
    %v561 = vmul.f32 %v553, %v51
    %v562 = vadd.f32 %v554, 0.0
    %v563 = vadd.f32 %v555, 0.0
    %v564 = vadd.f32 %v556, 0.0
    %v565 = vadd.f32 %v557, 0.0
    %v566 = vadd.f32 %v558, 0.0
    %v567 = vadd.f32 %v559, 0.0
    %v568 = vadd.f32 %v560, 0.0
    %v569 = vadd.f32 %v561, 0.0
    %570 = vrot.lane.b32.xlu0 %v303, 1
    %v571 = vpop.permute.xlu0 %570
    %572 = vrot.lane.b32.xlu0 %v305, 1
    %v573 = vpop.permute.xlu0 %572
    %574 = vrot.lane.b32.xlu0 %v307, 1
    %v575 = vpop.permute.xlu0 %574
    %576 = vrot.lane.b32.xlu0 %v309, 1
    %v577 = vpop.permute.xlu0 %576
    %578 = vrot.lane.b32.xlu0 %v304, 1
    %v579 = vpop.permute.xlu0 %578
    %580 = vrot.lane.b32.xlu0 %v306, 1
    %v581 = vpop.permute.xlu0 %580
    %582 = vrot.lane.b32.xlu0 %v308, 1
    %v583 = vpop.permute.xlu0 %582
    %584 = vrot.lane.b32.xlu0 %v310, 1
    %v585 = vpop.permute.xlu0 %584
    %vm586 = vcmp.lt.s32.totalorder %v28, 1
    %v587 = vsel %vm586, %v571, %v579
    %v588 = vsel %vm586, %v573, %v581
    %v589 = vsel %vm586, %v575, %v583
    %v590 = vsel %vm586, %v577, %v585
    %v591 = vsel %vm586, %v579, %v571
    %v592 = vsel %vm586, %v581, %v573
    %v593 = vsel %vm586, %v583, %v575
    %v594 = vsel %vm586, %v585, %v577
    %596 = vset.pattern.permute.xlu0 0
    %597 = vperm.xlu0 %596, %v326
    %v598 = vpop.permute.xlu0 %597
    %601 = vset.pattern.permute.xlu0 0
    %602 = vperm.xlu0 %601, %v327
    %v603 = vpop.permute.xlu0 %602
    %606 = vset.pattern.permute.xlu0 0
    %607 = vperm.xlu0 %606, %v328
    %v608 = vpop.permute.xlu0 %607
    %611 = vset.pattern.permute.xlu0 0
    %612 = vperm.xlu0 %611, %v329
    %v613 = vpop.permute.xlu0 %612
    %v615 = vmul.f32 %v591, %v598
    %v616 = vmul.f32 %v587, %v598
    %v617 = vmul.f32 %v592, %v603
    %v618 = vmul.f32 %v588, %v603
    %v619 = vmul.f32 %v593, %v608
    %v620 = vmul.f32 %v589, %v608
    %v621 = vmul.f32 %v594, %v613
    %v622 = vmul.f32 %v590, %v613
    %v623 = vmul.f32 %v615, %v38
    %v624 = vmul.f32 %v616, %v39
    %v625 = vmul.f32 %v617, %v38
    %v626 = vmul.f32 %v618, %v39
    %v627 = vmul.f32 %v619, %v38
    %v628 = vmul.f32 %v620, %v39
    %v629 = vmul.f32 %v621, %v38
    %v630 = vmul.f32 %v622, %v39
    %v631 = vadd.f32 %v623, 0.0
    %v632 = vadd.f32 %v624, 0.0
    %v633 = vadd.f32 %v625, 0.0
    %v634 = vadd.f32 %v626, 0.0
    %v635 = vadd.f32 %v627, 0.0
    %v636 = vadd.f32 %v628, 0.0
    %v637 = vadd.f32 %v629, 0.0
    %v638 = vadd.f32 %v630, 0.0
    %640 = vset.pattern.permute.xlu0 0
    %641 = vperm.xlu0 %640, %v331
    %v642 = vpop.permute.xlu0 %641
    %645 = vset.pattern.permute.xlu0 0
    %646 = vperm.xlu0 %645, %v332
    %v647 = vpop.permute.xlu0 %646
    %650 = vset.pattern.permute.xlu0 0
    %651 = vperm.xlu0 %650, %v333
    %v652 = vpop.permute.xlu0 %651
    %655 = vset.pattern.permute.xlu0 0
    %656 = vperm.xlu0 %655, %v334
    %v657 = vpop.permute.xlu0 %656
    %v659 = vmul.f32 %v303, %v642
    %v660 = vmul.f32 %v304, %v642
    %v661 = vmul.f32 %v305, %v647
    %v662 = vmul.f32 %v306, %v647
    %v663 = vmul.f32 %v307, %v652
    %v664 = vmul.f32 %v308, %v652
    %v665 = vmul.f32 %v309, %v657
    %v666 = vmul.f32 %v310, %v657
    %v667 = vadd.f32 %v631, %v659
    %v668 = vadd.f32 %v632, %v660
    %v669 = vadd.f32 %v633, %v661
    %v670 = vadd.f32 %v634, %v662
    %v671 = vadd.f32 %v635, %v663
    %v672 = vadd.f32 %v636, %v664
    %v673 = vadd.f32 %v637, %v665
    %v674 = vadd.f32 %v638, %v666
    %675 = vrot.lane.b32.xlu0 %v303, 127
    %v676 = vpop.permute.xlu0 %675
    %677 = vrot.lane.b32.xlu0 %v305, 127
    %v678 = vpop.permute.xlu0 %677
    %679 = vrot.lane.b32.xlu0 %v307, 127
    %v680 = vpop.permute.xlu0 %679
    %681 = vrot.lane.b32.xlu0 %v309, 127
    %v682 = vpop.permute.xlu0 %681
    %683 = vrot.lane.b32.xlu0 %v304, 127
    %v684 = vpop.permute.xlu0 %683
    %685 = vrot.lane.b32.xlu0 %v306, 127
    %v686 = vpop.permute.xlu0 %685
    %687 = vrot.lane.b32.xlu0 %v308, 127
    %v688 = vpop.permute.xlu0 %687
    %689 = vrot.lane.b32.xlu0 %v310, 127
    %v690 = vpop.permute.xlu0 %689
    %vm691 = vcmp.lt.s32.totalorder %v28, 127
    %v692 = vsel %vm691, %v676, %v684
    %v693 = vsel %vm691, %v678, %v686
    %v694 = vsel %vm691, %v680, %v688
    %v695 = vsel %vm691, %v682, %v690
    %v696 = vsel %vm691, %v684, %v676
    %v697 = vsel %vm691, %v686, %v678
    %v698 = vsel %vm691, %v688, %v680
    %v699 = vsel %vm691, %v690, %v682
    %701 = vset.pattern.permute.xlu0 0
    %702 = vperm.xlu0 %701, %v336
    %v703 = vpop.permute.xlu0 %702
    %706 = vset.pattern.permute.xlu0 0
    %707 = vperm.xlu0 %706, %v337
    %v708 = vpop.permute.xlu0 %707
    %711 = vset.pattern.permute.xlu0 0
    %712 = vperm.xlu0 %711, %v338
    %v713 = vpop.permute.xlu0 %712
    %716 = vset.pattern.permute.xlu0 0
    %717 = vperm.xlu0 %716, %v339
    %v718 = vpop.permute.xlu0 %717
    %v720 = vmul.f32 %v692, %v703
    %v721 = vmul.f32 %v696, %v703
    %v722 = vmul.f32 %v693, %v708
    %v723 = vmul.f32 %v697, %v708
    %v724 = vmul.f32 %v694, %v713
    %v725 = vmul.f32 %v698, %v713
    %v726 = vmul.f32 %v695, %v718
    %v727 = vmul.f32 %v699, %v718
    %v728 = vmul.f32 %v720, %v44
    %v729 = vmul.f32 %v721, %v45
    %v730 = vmul.f32 %v722, %v44
    %v731 = vmul.f32 %v723, %v45
    %v732 = vmul.f32 %v724, %v44
    %v733 = vmul.f32 %v725, %v45
    %v734 = vmul.f32 %v726, %v44
    %v735 = vmul.f32 %v727, %v45
    %v736 = vadd.f32 %v667, %v728
    %v737 = vadd.f32 %v668, %v729
    %v738 = vadd.f32 %v669, %v730
    %v739 = vadd.f32 %v670, %v731
    %v740 = vadd.f32 %v671, %v732
    %v741 = vadd.f32 %v672, %v733
    %v742 = vadd.f32 %v673, %v734
    %v743 = vadd.f32 %v674, %v735
    %v744 = vadd.f32 %v562, %v736
    %v745 = vadd.f32 %v563, %v737
    %v746 = vadd.f32 %v564, %v738
    %v747 = vadd.f32 %v565, %v739
    %v748 = vadd.f32 %v566, %v740
    %v749 = vadd.f32 %v567, %v741
    %v750 = vadd.f32 %v568, %v742
    %v751 = vadd.f32 %v569, %v743
    %752 = vrot.lane.b32.xlu0 %v303, 113
    %v753 = vpop.permute.xlu0 %752
    %754 = vrot.lane.b32.xlu0 %v305, 113
    %v755 = vpop.permute.xlu0 %754
    %756 = vrot.lane.b32.xlu0 %v307, 113
    %v757 = vpop.permute.xlu0 %756
    %758 = vrot.lane.b32.xlu0 %v309, 113
    %v759 = vpop.permute.xlu0 %758
    %760 = vrot.lane.b32.xlu0 %v304, 113
    %v761 = vpop.permute.xlu0 %760
    %762 = vrot.lane.b32.xlu0 %v306, 113
    %v763 = vpop.permute.xlu0 %762
    %764 = vrot.lane.b32.xlu0 %v308, 113
    %v765 = vpop.permute.xlu0 %764
    %766 = vrot.lane.b32.xlu0 %v310, 113
    %v767 = vpop.permute.xlu0 %766
    %vm768 = vcmp.lt.s32.totalorder %v28, 113
    %v769 = vsel %vm768, %v753, %v761
    %v770 = vsel %vm768, %v755, %v763
    %v771 = vsel %vm768, %v757, %v765
    %v772 = vsel %vm768, %v759, %v767
    %v773 = vsel %vm768, %v761, %v753
    %v774 = vsel %vm768, %v763, %v755
    %v775 = vsel %vm768, %v765, %v757
    %v776 = vsel %vm768, %v767, %v759
    %778 = vset.pattern.permute.xlu0 0
    %779 = vperm.xlu0 %778, %v341
    %v780 = vpop.permute.xlu0 %779
    %783 = vset.pattern.permute.xlu0 0
    %784 = vperm.xlu0 %783, %v342
    %v785 = vpop.permute.xlu0 %784
    %788 = vset.pattern.permute.xlu0 0
    %789 = vperm.xlu0 %788, %v343
    %v790 = vpop.permute.xlu0 %789
    %793 = vset.pattern.permute.xlu0 0
    %794 = vperm.xlu0 %793, %v344
    %v795 = vpop.permute.xlu0 %794
    %v797 = vmul.f32 %v769, %v780
    %v798 = vmul.f32 %v773, %v780
    %v799 = vmul.f32 %v770, %v785
    %v800 = vmul.f32 %v774, %v785
    %v801 = vmul.f32 %v771, %v790
    %v802 = vmul.f32 %v775, %v790
    %v803 = vmul.f32 %v772, %v795
    %v804 = vmul.f32 %v776, %v795
    %v805 = vmul.f32 %v797, %v38
    %v806 = vmul.f32 %v798, %v39
    %v807 = vmul.f32 %v799, %v38
    %v808 = vmul.f32 %v800, %v39
    %v809 = vmul.f32 %v801, %v38
    %v810 = vmul.f32 %v802, %v39
    %v811 = vmul.f32 %v803, %v38
    %v812 = vmul.f32 %v804, %v39
    %v813 = vadd.f32 %v805, 0.0
    %v814 = vadd.f32 %v806, 0.0
    %v815 = vadd.f32 %v807, 0.0
    %v816 = vadd.f32 %v808, 0.0
    %v817 = vadd.f32 %v809, 0.0
    %v818 = vadd.f32 %v810, 0.0
    %v819 = vadd.f32 %v811, 0.0
    %v820 = vadd.f32 %v812, 0.0
    %821 = vrot.lane.b32.xlu0 %v303, 112
    %v822 = vpop.permute.xlu0 %821
    %823 = vrot.lane.b32.xlu0 %v305, 112
    %v824 = vpop.permute.xlu0 %823
    %825 = vrot.lane.b32.xlu0 %v307, 112
    %v826 = vpop.permute.xlu0 %825
    %827 = vrot.lane.b32.xlu0 %v309, 112
    %v828 = vpop.permute.xlu0 %827
    %829 = vrot.lane.b32.xlu0 %v304, 112
    %v830 = vpop.permute.xlu0 %829
    %831 = vrot.lane.b32.xlu0 %v306, 112
    %v832 = vpop.permute.xlu0 %831
    %833 = vrot.lane.b32.xlu0 %v308, 112
    %v834 = vpop.permute.xlu0 %833
    %835 = vrot.lane.b32.xlu0 %v310, 112
    %v836 = vpop.permute.xlu0 %835
    %vm837 = vcmp.lt.s32.totalorder %v28, 112
    %v838 = vsel %vm837, %v822, %v830
    %v839 = vsel %vm837, %v824, %v832
    %v840 = vsel %vm837, %v826, %v834
    %v841 = vsel %vm837, %v828, %v836
    %v842 = vsel %vm837, %v830, %v822
    %v843 = vsel %vm837, %v832, %v824
    %v844 = vsel %vm837, %v834, %v826
    %v845 = vsel %vm837, %v836, %v828
    %847 = vset.pattern.permute.xlu0 0
    %848 = vperm.xlu0 %847, %v346
    %v849 = vpop.permute.xlu0 %848
    %852 = vset.pattern.permute.xlu0 0
    %853 = vperm.xlu0 %852, %v347
    %v854 = vpop.permute.xlu0 %853
    %857 = vset.pattern.permute.xlu0 0
    %858 = vperm.xlu0 %857, %v348
    %v859 = vpop.permute.xlu0 %858
    %862 = vset.pattern.permute.xlu0 0
    %863 = vperm.xlu0 %862, %v349
    %v864 = vpop.permute.xlu0 %863
    %v866 = vmul.f32 %v838, %v849
    %v867 = vmul.f32 %v842, %v849
    %v868 = vmul.f32 %v839, %v854
    %v869 = vmul.f32 %v843, %v854
    %v870 = vmul.f32 %v840, %v859
    %v871 = vmul.f32 %v844, %v859
    %v872 = vmul.f32 %v841, %v864
    %v873 = vmul.f32 %v845, %v864
    %v874 = vadd.f32 %v813, %v866
    %v875 = vadd.f32 %v814, %v867
    %v876 = vadd.f32 %v815, %v868
    %v877 = vadd.f32 %v816, %v869
    %v878 = vadd.f32 %v817, %v870
    %v879 = vadd.f32 %v818, %v871
    %v880 = vadd.f32 %v819, %v872
    %v881 = vadd.f32 %v820, %v873
    %882 = vrot.lane.b32.xlu0 %v303, 111
    %v883 = vpop.permute.xlu0 %882
    %884 = vrot.lane.b32.xlu0 %v305, 111
    %v885 = vpop.permute.xlu0 %884
    %886 = vrot.lane.b32.xlu0 %v307, 111
    %v887 = vpop.permute.xlu0 %886
    %888 = vrot.lane.b32.xlu0 %v309, 111
    %v889 = vpop.permute.xlu0 %888
    %890 = vrot.lane.b32.xlu0 %v304, 111
    %v891 = vpop.permute.xlu0 %890
    %892 = vrot.lane.b32.xlu0 %v306, 111
    %v893 = vpop.permute.xlu0 %892
    %894 = vrot.lane.b32.xlu0 %v308, 111
    %v895 = vpop.permute.xlu0 %894
    %896 = vrot.lane.b32.xlu0 %v310, 111
    %v897 = vpop.permute.xlu0 %896
    %vm898 = vcmp.lt.s32.totalorder %v28, 111
    %v899 = vsel %vm898, %v883, %v891
    %v900 = vsel %vm898, %v885, %v893
    %v901 = vsel %vm898, %v887, %v895
    %v902 = vsel %vm898, %v889, %v897
    %v903 = vsel %vm898, %v891, %v883
    %v904 = vsel %vm898, %v893, %v885
    %v905 = vsel %vm898, %v895, %v887
    %v906 = vsel %vm898, %v897, %v889
    %908 = vset.pattern.permute.xlu0 0
    %909 = vperm.xlu0 %908, %v351
    %v910 = vpop.permute.xlu0 %909
    %913 = vset.pattern.permute.xlu0 0
    %914 = vperm.xlu0 %913, %v352
    %v915 = vpop.permute.xlu0 %914
    %918 = vset.pattern.permute.xlu0 0
    %919 = vperm.xlu0 %918, %v353
    %v920 = vpop.permute.xlu0 %919
    %923 = vset.pattern.permute.xlu0 0
    %924 = vperm.xlu0 %923, %v354
    %v925 = vpop.permute.xlu0 %924
    %v927 = vmul.f32 %v899, %v910
    %v928 = vmul.f32 %v903, %v910
    %v929 = vmul.f32 %v900, %v915
    %v930 = vmul.f32 %v904, %v915
    %v931 = vmul.f32 %v901, %v920
    %v932 = vmul.f32 %v905, %v920
    %v933 = vmul.f32 %v902, %v925
    %v934 = vmul.f32 %v906, %v925
    %v935 = vmul.f32 %v927, %v44
    %v936 = vmul.f32 %v928, %v45
    %v937 = vmul.f32 %v929, %v44
    %v938 = vmul.f32 %v930, %v45
    %v939 = vmul.f32 %v931, %v44
    %v940 = vmul.f32 %v932, %v45
    %v941 = vmul.f32 %v933, %v44
    %v942 = vmul.f32 %v934, %v45
    %v943 = vadd.f32 %v874, %v935
    %v944 = vadd.f32 %v875, %v936
    %v945 = vadd.f32 %v876, %v937
    %v946 = vadd.f32 %v877, %v938
    %v947 = vadd.f32 %v878, %v939
    %v948 = vadd.f32 %v879, %v940
    %v949 = vadd.f32 %v880, %v941
    %v950 = vadd.f32 %v881, %v942
    %v951 = vmul.f32 %v943, %v56
    %v952 = vmul.f32 %v944, %v57
    %v953 = vmul.f32 %v945, %v56
    %v954 = vmul.f32 %v946, %v57
    %v955 = vmul.f32 %v947, %v56
    %v956 = vmul.f32 %v948, %v57
    %v957 = vmul.f32 %v949, %v56
    %v958 = vmul.f32 %v950, %v57
    %v959 = vadd.f32 %v744, %v951
    %v960 = vadd.f32 %v745, %v952
    %v961 = vadd.f32 %v746, %v953
    %v962 = vadd.f32 %v747, %v954
    %v963 = vadd.f32 %v748, %v955
    %v964 = vadd.f32 %v749, %v956
    %v965 = vadd.f32 %v750, %v957
    %v966 = vadd.f32 %v751, %v958
    %v967 = vld [vmem:[%s4] sm:$0xff]
    %v968 = vld [vmem:[%s4 + $0x8] sm:$0xff]
    %v969 = vld [vmem:[%s4 + $0x10] sm:$0xff]
    %v970 = vld [vmem:[%s4 + $0x18] sm:$0xff]
    %972 = vset.pattern.permute.xlu0 0
    %973 = vperm.xlu0 %972, %v967
    %v974 = vpop.permute.xlu0 %973
    %977 = vset.pattern.permute.xlu0 0
    %978 = vperm.xlu0 %977, %v968
    %v979 = vpop.permute.xlu0 %978
    %982 = vset.pattern.permute.xlu0 0
    %983 = vperm.xlu0 %982, %v969
    %v984 = vpop.permute.xlu0 %983
    %987 = vset.pattern.permute.xlu0 0
    %988 = vperm.xlu0 %987, %v970
    %v989 = vpop.permute.xlu0 %988
    %v991 = vadd.f32 %v959, %v974
    %v992 = vadd.f32 %v960, %v974
    %v993 = vadd.f32 %v961, %v979
    %v994 = vadd.f32 %v962, %v979
    %v995 = vadd.f32 %v963, %v984
    %v996 = vadd.f32 %v964, %v984
    %v997 = vadd.f32 %v965, %v989
    %v998 = vadd.f32 %v966, %v989
    %v999 = vsub.f32 0.0, %v991
    %v1000 = vsub.f32 0.0, %v992
    %v1001 = vsub.f32 0.0, %v993
    %v1002 = vsub.f32 0.0, %v994
    %v1003 = vsub.f32 0.0, %v995
    %v1004 = vsub.f32 0.0, %v996
    %v1005 = vsub.f32 0.0, %v997
    %v1006 = vsub.f32 0.0, %v998
    %v1007 = vmul.f32 %v999, 1.442695
    %v1008 = vpow.pop %v1007
    %v1009 = vmul.f32 %v1000, 1.442695
    %v1010 = vpow.pop %v1009
    %v1011 = vmul.f32 %v1001, 1.442695
    %v1012 = vpow.pop %v1011
    %v1013 = vmul.f32 %v1002, 1.442695
    %v1014 = vpow.pop %v1013
    %v1015 = vmul.f32 %v1003, 1.442695
    %v1016 = vpow.pop %v1015
    %v1017 = vmul.f32 %v1004, 1.442695
    %v1018 = vpow.pop %v1017
    %v1019 = vmul.f32 %v1005, 1.442695
    %v1020 = vpow.pop %v1019
    %v1021 = vmul.f32 %v1006, 1.442695
    %v1022 = vpow.pop %v1021
    %v1023 = vadd.f32 %v1008, 1.0
    %v1024 = vadd.f32 %v1010, 1.0
    %v1025 = vadd.f32 %v1012, 1.0
    %v1026 = vadd.f32 %v1014, 1.0
    %v1027 = vadd.f32 %v1016, 1.0
    %v1028 = vadd.f32 %v1018, 1.0
    %v1029 = vadd.f32 %v1020, 1.0
    %v1030 = vadd.f32 %v1022, 1.0
    %v1031 = vrcp.pop %v1023
    %v1032 = vmul.f32 %v1023, %v1031
    %v1033 = vsub.f32 1.0, %v1032
    %v1034 = vmul.f32 %v1031, %v1033
    %v1035 = vadd.f32 %v1031, %v1034
    %vm1036 = vweird.f32 %v1023
    %vm1037 = vweird.f32 %v1031
    %vm1038 = vmor %vm1036, %vm1037
    %v1039 = vsel %vm1038, %v1031, %v1035
    %v1040 = vand.u32 2147483647, %v1023
    %vm1041 = vcmp.eq.f32.partialorder %v1040, 8.507059e+37
    %v1042 = vand.u32 %v1023, 2147483648
    %v1043 = vor.u32 1.1754944e-38, %v1042
    %v1044 = vsel %vm1041, %v1043, %v1039
    %v1045 = vrcp.pop %v1024
    %v1046 = vmul.f32 %v1024, %v1045
    %v1047 = vsub.f32 1.0, %v1046
    %v1048 = vmul.f32 %v1045, %v1047
    %v1049 = vadd.f32 %v1045, %v1048
    %vm1050 = vweird.f32 %v1024
    %vm1051 = vweird.f32 %v1045
    %vm1052 = vmor %vm1050, %vm1051
    %v1053 = vsel %vm1052, %v1045, %v1049
    %v1054 = vand.u32 2147483647, %v1024
    %vm1055 = vcmp.eq.f32.partialorder %v1054, 8.507059e+37
    %v1056 = vand.u32 %v1024, 2147483648
    %v1057 = vor.u32 1.1754944e-38, %v1056
    %v1058 = vsel %vm1055, %v1057, %v1053
    %v1059 = vrcp.pop %v1025
    %v1060 = vmul.f32 %v1025, %v1059
    %v1061 = vsub.f32 1.0, %v1060
    %v1062 = vmul.f32 %v1059, %v1061
    %v1063 = vadd.f32 %v1059, %v1062
    %vm1064 = vweird.f32 %v1025
    %vm1065 = vweird.f32 %v1059
    %vm1066 = vmor %vm1064, %vm1065
    %v1067 = vsel %vm1066, %v1059, %v1063
    %v1068 = vand.u32 2147483647, %v1025
    %vm1069 = vcmp.eq.f32.partialorder %v1068, 8.507059e+37
    %v1070 = vand.u32 %v1025, 2147483648
    %v1071 = vor.u32 1.1754944e-38, %v1070
    %v1072 = vsel %vm1069, %v1071, %v1067
    %v1073 = vrcp.pop %v1026
    %v1074 = vmul.f32 %v1026, %v1073
    %v1075 = vsub.f32 1.0, %v1074
    %v1076 = vmul.f32 %v1073, %v1075
    %v1077 = vadd.f32 %v1073, %v1076
    %vm1078 = vweird.f32 %v1026
    %vm1079 = vweird.f32 %v1073
    %vm1080 = vmor %vm1078, %vm1079
    %v1081 = vsel %vm1080, %v1073, %v1077
    %v1082 = vand.u32 2147483647, %v1026
    %vm1083 = vcmp.eq.f32.partialorder %v1082, 8.507059e+37
    %v1084 = vand.u32 %v1026, 2147483648
    %v1085 = vor.u32 1.1754944e-38, %v1084
    %v1086 = vsel %vm1083, %v1085, %v1081
    %v1087 = vrcp.pop %v1027
    %v1088 = vmul.f32 %v1027, %v1087
    %v1089 = vsub.f32 1.0, %v1088
    %v1090 = vmul.f32 %v1087, %v1089
    %v1091 = vadd.f32 %v1087, %v1090
    %vm1092 = vweird.f32 %v1027
    %vm1093 = vweird.f32 %v1087
    %vm1094 = vmor %vm1092, %vm1093
    %v1095 = vsel %vm1094, %v1087, %v1091
    %v1096 = vand.u32 2147483647, %v1027
    %vm1097 = vcmp.eq.f32.partialorder %v1096, 8.507059e+37
    %v1098 = vand.u32 %v1027, 2147483648
    %v1099 = vor.u32 1.1754944e-38, %v1098
    %v1100 = vsel %vm1097, %v1099, %v1095
    %v1101 = vrcp.pop %v1028
    %v1102 = vmul.f32 %v1028, %v1101
    %v1103 = vsub.f32 1.0, %v1102
    %v1104 = vmul.f32 %v1101, %v1103
    %v1105 = vadd.f32 %v1101, %v1104
    %vm1106 = vweird.f32 %v1028
    %vm1107 = vweird.f32 %v1101
    %vm1108 = vmor %vm1106, %vm1107
    %v1109 = vsel %vm1108, %v1101, %v1105
    %v1110 = vand.u32 2147483647, %v1028
    %vm1111 = vcmp.eq.f32.partialorder %v1110, 8.507059e+37
    %v1112 = vand.u32 %v1028, 2147483648
    %v1113 = vor.u32 1.1754944e-38, %v1112
    %v1114 = vsel %vm1111, %v1113, %v1109
    %v1115 = vrcp.pop %v1029
    %v1116 = vmul.f32 %v1029, %v1115
    %v1117 = vsub.f32 1.0, %v1116
    %v1118 = vmul.f32 %v1115, %v1117
    %v1119 = vadd.f32 %v1115, %v1118
    %vm1120 = vweird.f32 %v1029
    %vm1121 = vweird.f32 %v1115
    %vm1122 = vmor %vm1120, %vm1121
    %v1123 = vsel %vm1122, %v1115, %v1119
    %v1124 = vand.u32 2147483647, %v1029
    %vm1125 = vcmp.eq.f32.partialorder %v1124, 8.507059e+37
    %v1126 = vand.u32 %v1029, 2147483648
    %v1127 = vor.u32 1.1754944e-38, %v1126
    %v1128 = vsel %vm1125, %v1127, %v1123
    %v1129 = vrcp.pop %v1030
    %v1130 = vmul.f32 %v1030, %v1129
    %v1131 = vsub.f32 1.0, %v1130
    %v1132 = vmul.f32 %v1129, %v1131
    %v1133 = vadd.f32 %v1129, %v1132
    %vm1134 = vweird.f32 %v1030
    %vm1135 = vweird.f32 %v1129
    %vm1136 = vmor %vm1134, %vm1135
    %v1137 = vsel %vm1136, %v1129, %v1133
    %v1138 = vand.u32 2147483647, %v1030
    %vm1139 = vcmp.eq.f32.partialorder %v1138, 8.507059e+37
    %v1140 = vand.u32 %v1030, 2147483648
    %v1141 = vor.u32 1.1754944e-38, %v1140
    %v1142 = vsel %vm1139, %v1141, %v1137
    %v1143 = vmul.f32 %v991, %v1044
    %v1144 = vmul.f32 %v992, %v1058
    %v1145 = vmul.f32 %v993, %v1072
    %v1146 = vmul.f32 %v994, %v1086
    %v1147 = vmul.f32 %v995, %v1100
    %v1148 = vmul.f32 %v996, %v1114
    %v1149 = vmul.f32 %v997, %v1128
    %v1150 = vmul.f32 %v998, %v1142
    %v1151 = vld [vmem:[%s5] sm:$0xff]
    %v1152 = vld [vmem:[%s6] sm:$0xff]
    %1154 = vset.pattern.permute.xlu0 0
    %1155 = vperm.xlu0 %1154, %v1152
    %v1156 = vpop.permute.xlu0 %1155
    %vm1158 = vcmask 261120
    %v1160 = vsel %vm1158, %v1151, 0
    %1162 = vmatpush.msra.mxu0 0.0
    %1163 = vmatpush.msra.mxu0 0.0
    %1164 = vmatpush.msra.mxu0 0.0
    %1165 = vmatpush.msra.mxu0 0.0
    %1166 = vmatpush.msra.mxu0 0.0
    %1167 = vmatpush.msra.mxu0 0.0
    %1168 = vmatpush.msra.mxu0 0.0
    %1169 = vmatpush.msra.mxu0 0.0
    %1170 = vmatpush.msra.mxu0 0.0
    %1171 = vmatpush.msra.mxu0 0.0
    %1172 = vmatpush.msra.mxu0 0.0
    %1173 = vmatpush.msra.mxu0 0.0
    %1174 = vmatpush.msra.mxu0 %v1149
    %1175 = vmatpush.msra.mxu0 %v1147
    %1176 = vmatpush.msra.mxu0 %v1145
    %1177 = vmatpush.msra.mxu0 %v1143
    %1178 = vmatmul.f32.gmra.mxu0 %v1160
    %v1179 = vpop.f32.mrf.mxu0
    %v1180 = vadd.f32 %v1156, %v1179
    %1181 = vdwg.mxu0
    %1182 = vmatpush.msra.mxu0 0.0
    %1183 = vmatpush.msra.mxu0 0.0
    %1184 = vmatpush.msra.mxu0 0.0
    %1185 = vmatpush.msra.mxu0 0.0
    %1186 = vmatpush.msra.mxu0 0.0
    %1187 = vmatpush.msra.mxu0 0.0
    %1188 = vmatpush.msra.mxu0 0.0
    %1189 = vmatpush.msra.mxu0 0.0
    %1190 = vmatpush.msra.mxu0 0.0
    %1191 = vmatpush.msra.mxu0 0.0
    %1192 = vmatpush.msra.mxu0 0.0
    %1193 = vmatpush.msra.mxu0 0.0
    %1194 = vmatpush.msra.mxu0 %v1150
    %1195 = vmatpush.msra.mxu0 %v1148
    %1196 = vmatpush.msra.mxu0 %v1146
    %1197 = vmatpush.msra.mxu0 %v1144
    %1198 = vmatmul.f32.gmra.mxu0 %v1160
    %v1199 = vpop.f32.mrf.mxu0
    %v1200 = vadd.f32 %v1156, %v1199
    %1201 = vdwg.mxu0
    %v1202 = vadd.f32 %v1180, %v58
    %v1203 = vadd.f32 %v1200, %v59
    %1204 = vst [vmem:[#allocation2] sm:$0xff] %v1202
    %1205 = vst [vmem:[#allocation2 + $0x8] sm:$0xff] %v1203
    // Predicated region
    $region30: #{tpu_custom_call.1} parent=1 // pred_check
      _
    $region31: #{tpu_custom_call.1} parent=1 // pred_check_branch
      %1207 = sbr.rel (0) target = $region33
    $region32: #{tpu_custom_call.1} parent=1 // pred_region
      %1209 = vsyncadd [#allocation3], 0
      %s1211 = sshll.u32 [#allocation2], 4
      %s1212 = int_to_ptr.vmem [resolvable:$true] %s1211
      %s1213 = sshll.u32 %s7, 4
      %s1214 = int_to_ptr.hbm [resolvable:$true] %s1213
      %1216 = dma.vmem_to_hbm [thread:$0]  %s1212, 256, %s1214, [#allocation3]
    $region33: #{tpu_custom_call.1} parent=1 // pred_fallthru
      _
    // Predicated region
    $region34: #{tpu_custom_call.1} parent=1 // pred_check
      _
    $region35: #{tpu_custom_call.1} parent=1 // pred_check_branch
      %1218 = sbr.rel (0) target = $region37
    $region36: #{tpu_custom_call.1} parent=1 // pred_region
      %1220 = dma.done [#allocation3], 256
    $region37: #{tpu_custom_call.1} parent=1 // pred_fallthru
      _
    %1221 = vsyncpa [#allocation3], 1

</llo_original>
